<compile_context>
chip_gen: v7x
topology: tpu7x:2x2x1
jax: 0.10.0
libtpu: 0.0.40
codegen_flags: <defaults>
</compile_context>

<pallas_src>
import functools

import jax
import jax.numpy as jnp
from jax import lax
from jax.experimental import pallas as pl
from jax.experimental.pallas import tpu as pltpu


def _correlation_loss_kernel(pred_ref, label_ref, out_ref, *, batch, tile_rows):
    """One batch tile: (tile_rows, L) -> per-tile partial loss sum."""
    pred = pred_ref[...].astype(jnp.float32)     # (TB, L)
    label = label_ref[...].astype(jnp.float32)   # (TB, L)
    num_labels = pred.shape[1]

    pos_mask = label > 0.0      # reference's "nonzero_index"
    neg_mask = label == 0.0     # reference's "zero_index"

    # Per-row shift for numerical range in the mixed branch; the product
    # a_pos * b_neg is invariant under pred -> pred - c.
    row_max = jnp.max(pred, axis=1, keepdims=True)
    row_min = jnp.min(pred, axis=1, keepdims=True)
    c = 0.5 * (row_max + row_min)                # (TB, 1)

    # Single exponential per element (pos/neg masks are disjoint, so exact):
    #   pos elements contribute exp(-(p - c)), neg elements contribute exp(p - c).
    s = jnp.where(pos_mask, c - pred, pred - c)
    e = jnp.exp(s)

    a_pos_s = jnp.sum(jnp.where(pos_mask, e, 0.0), axis=1, keepdims=True)  # e^{+c} * Σ_pos e^{-p}
    b_neg_s = jnp.sum(jnp.where(neg_mask, e, 0.0), axis=1, keepdims=True)  # e^{-c} * Σ_neg e^{+p}

    # n_one matches the reference's int(sum(label[i])) for binary 0/1 labels.
    n_one = jnp.sum(label, axis=1, keepdims=True)
    n_zero = jnp.float32(num_labels) - n_one

    # Three-way branch per row. Shift cancels in the mixed branch; the
    # degenerate branches undo it with one scalar exp per row.
    loss_pair = a_pos_s * b_neg_s / jnp.maximum(n_one * n_zero, 1.0)
    loss_all_zero = b_neg_s * jnp.exp(c - 1.0) / jnp.maximum(n_zero, 1.0)
    loss_all_one = a_pos_s * jnp.exp(-c) / jnp.maximum(n_one, 1.0)

    loss_row = jnp.where(
        n_one == 0.0, loss_all_zero,
        jnp.where(n_zero == 0.0, loss_all_one, loss_pair))

    # Mask padded rows of the (possibly partial) last tile.
    row0 = pl.program_id(0) * tile_rows
    row_ids = row0 + lax.broadcasted_iota(jnp.int32, (tile_rows, 1), 0)
    loss_row = jnp.where(row_ids < batch, loss_row, 0.0)

    tile_sum = jnp.sum(loss_row)
    # Lane-dense (1, 8, 128) store (no masked vst); wrapper reads [i, 0, 0].
    out_ref[...] = jnp.broadcast_to(tile_sum, out_ref.shape)


def correlation_loss(pred, label, *, tile_rows=None,
                     vmem_tile_budget_bytes=8 * 1024 * 1024):
    """pred, label: (batch, num_labels). Returns scalar float32 loss."""
    assert pred.ndim == 2 and pred.shape == label.shape
    # TODO(synk): the PyTorch 1-D `label` branch is not reproduced — the
    # reference itself raises (it indexes label.shape[1] on a 1-D tensor).
    # TODO(synk): for very small num_labels (L << 128) a lane-packed layout
    # (k rows per 128-lane vector + segmented reduction) would further cut
    # VPU/EUP vreg work; skipped here to keep the kernel simple and robust.
    B, L = pred.shape

    if tile_rows is None:
        # 2 inputs x 2 pipeline buffers x tile bytes must stay well inside the
        # scoped VMEM budget on every generation (v5e/v6e/v7x).
        bytes_per_row = (pred.dtype.itemsize + label.dtype.itemsize) * L
        max_rows = max(8, vmem_tile_budget_bytes // (2 * bytes_per_row))
        if max_rows >= B:
            tile_rows = B                       # single full-dim block is legal
        else:
            tile_rows = max(8, (max_rows // 8) * 8)   # sublane-aligned tiles
    num_tiles = pl.cdiv(B, tile_rows)

    kernel = functools.partial(
        _correlation_loss_kernel, batch=B, tile_rows=tile_rows)

    in_bytes = B * L * (pred.dtype.itemsize + label.dtype.itemsize)
    cost = pl.CostEstimate(
        flops=8 * B * L,
        transcendentals=B * L + 3 * B,
        bytes_accessed=in_bytes + num_tiles * 8 * 128 * 4,
    )

    partial = pl.pallas_call(
        kernel,
        out_shape=jax.ShapeDtypeStruct((num_tiles, 8, 128), jnp.float32),
        grid=(num_tiles,),
        in_specs=[
            pl.BlockSpec((tile_rows, L), lambda i: (i, 0)),
            pl.BlockSpec((tile_rows, L), lambda i: (i, 0)),
        ],
        out_specs=pl.BlockSpec((1, 8, 128), lambda i: (i, 0, 0)),
        compiler_params=pltpu.CompilerParams(
            dimension_semantics=("parallel",),
            vmem_limit_bytes=32 * 1024 * 1024,
        ),
        cost_estimate=cost,
    )(pred, label)
    return jnp.sum(partial[:, 0, 0])


def _reference(pred, label):
    # Pure-JAX re-implementation of the PyTorch loops (validation only).
    total = 0.0
    pred = jnp.asarray(pred, jnp.float32)
    label = jnp.asarray(label, jnp.float32)
    B, L = label.shape
    for i in range(B):
        n_one = int(jnp.sum(label[i]))
        n_zero = L - n_one
        zero_idx = [l for l in range(L) if float(label[i, l]) == 0.0]
        nonzero_idx = [l for l in range(L) if float(label[i, l]) > 0.0]
        loss = 0.0
        if n_one == 0:
            for l in zero_idx:
                loss += float(jnp.exp(pred[i, l] - 1.0))
            loss /= n_zero
        elif n_zero == 0:
            for l in nonzero_idx:
                loss += float(jnp.exp(-pred[i, l]))
            loss /= n_one
        else:
            for k in nonzero_idx:
                for l in zero_idx:
                    loss += float(jnp.exp(-(pred[i, k] - pred[i, l])))
            loss /= n_one * n_zero
        total += loss
    return total


if __name__ == "__main__":
    key = jax.random.PRNGKey(0)
    k_pred, k_label = jax.random.split(key)

    B, L = 12, 16
    pred = 2.0 * jax.random.normal(k_pred, (B, L), dtype=jnp.float32)
    label = (jax.random.uniform(k_label, (B, L)) > 0.5).astype(jnp.float32)
    # Exercise all three branches: one all-zero row, one all-one row.
    label = label.at[1, :].set(0.0)
    label = label.at[2, :].set(1.0)

    ref = _reference(pred, label)

    # 1) Default tiling (single tile for these small shapes).
    out = jax.block_until_ready(correlation_loss(pred, label))
    assert abs(float(out) - float(ref)) < 1e-3 * max(1.0, abs(float(ref))), (
        float(out), float(ref))

    # 2) Forced multi-tile path (grid=2, padded last tile is masked).
    out_tiled = jax.block_until_ready(correlation_loss(pred, label, tile_rows=8))
    assert abs(float(out_tiled) - float(ref)) < 1e-3 * max(1.0, abs(float(ref))), (
        float(out_tiled), float(ref))

    print("KERNEL_OK")
</pallas_src>

<mosaic_0001>
module attributes {stable_mosaic.version = 11 : i64} {
  func.func @_correlation_loss_kernel(%arg0: i32, %arg1: memref<12x16xf32, #tpu.memory_space<vmem>>, %arg2: memref<12x16xf32, #tpu.memory_space<vmem>>, %arg3: memref<1x8x128xf32, #tpu.memory_space<vmem>>) attributes {dimension_semantics = [#tpu.dimension_semantics<parallel>], iteration_bounds = array<i64: 1>, scalar_prefetch = 0 : i64, scratch_operands = 0 : i64, tpu.core_type = #tpu.core_type<tc>, window_params = [{transform_indices = @transform_0, window_bounds = array<i64: 12, 16>}, {transform_indices = @transform_1, window_bounds = array<i64: 12, 16>}, {transform_indices = @transform_2, window_bounds = array<i64: 1, 8, 128>}]} {
    %c0 = arith.constant 0 : index
    %c0_0 = arith.constant 0 : index
    %0 = vector.load %arg1[%c0, %c0_0] : memref<12x16xf32, #tpu.memory_space<vmem>>, vector<12x16xf32>
    %c0_1 = arith.constant 0 : index
    %c0_2 = arith.constant 0 : index
    %1 = vector.load %arg2[%c0_1, %c0_2] : memref<12x16xf32, #tpu.memory_space<vmem>>, vector<12x16xf32>
    %cst = arith.constant 0.000000e+00 : f32
    %2 = vector.broadcast %cst : f32 to vector<12x16xf32>
    %3 = arith.cmpf ogt, %1, %2 : vector<12x16xf32>
    %cst_3 = arith.constant 0.000000e+00 : f32
    %4 = vector.broadcast %cst_3 : f32 to vector<12x16xf32>
    %5 = arith.cmpf oeq, %1, %4 : vector<12x16xf32>
    %cst_4 = arith.constant dense<0xFF800000> : vector<12xf32>
    %6 = vector.multi_reduction <maximumf>, %0, %cst_4 [1] : vector<12x16xf32> to vector<12xf32>
    %7 = vector.shape_cast %6 : vector<12xf32> to vector<12x1xf32>
    %cst_5 = arith.constant dense<0x7F800000> : vector<12xf32>
    %8 = vector.multi_reduction <minimumf>, %0, %cst_5 [1] : vector<12x16xf32> to vector<12xf32>
    %9 = vector.shape_cast %8 : vector<12xf32> to vector<12x1xf32>
    %10 = arith.addf %7, %9 : vector<12x1xf32>
    %cst_6 = arith.constant 5.000000e-01 : f32
    %11 = vector.broadcast %cst_6 : f32 to vector<12x1xf32>
    %12 = arith.mulf %11, %10 : vector<12x1xf32>
    %13 = vector.broadcast %12 : vector<12x1xf32> to vector<12x16xf32>
    %14 = arith.subf %13, %0 : vector<12x16xf32>
    %15 = vector.broadcast %12 : vector<12x1xf32> to vector<12x16xf32>
    %16 = arith.subf %0, %15 : vector<12x16xf32>
    %17 = arith.select %3, %14, %16 : vector<12x16xi1>, vector<12x16xf32>
    %18 = math.exp %17 : vector<12x16xf32>
    %cst_7 = arith.constant 0.000000e+00 : f32
    %19 = vector.broadcast %cst_7 : f32 to vector<12x16xf32>
    %20 = arith.select %3, %18, %19 : vector<12x16xi1>, vector<12x16xf32>
    %cst_8 = arith.constant dense<0.000000e+00> : vector<12xf32>
    %21 = vector.multi_reduction <add>, %20, %cst_8 [1] : vector<12x16xf32> to vector<12xf32>
    %22 = vector.shape_cast %21 : vector<12xf32> to vector<12x1xf32>
    %cst_9 = arith.constant 0.000000e+00 : f32
    %23 = vector.broadcast %cst_9 : f32 to vector<12x16xf32>
    %24 = arith.select %5, %18, %23 : vector<12x16xi1>, vector<12x16xf32>
    %cst_10 = arith.constant dense<0.000000e+00> : vector<12xf32>
    %25 = vector.multi_reduction <add>, %24, %cst_10 [1] : vector<12x16xf32> to vector<12xf32>
    %26 = vector.shape_cast %25 : vector<12xf32> to vector<12x1xf32>
    %cst_11 = arith.constant dense<0.000000e+00> : vector<12xf32>
    %27 = vector.multi_reduction <add>, %1, %cst_11 [1] : vector<12x16xf32> to vector<12xf32>
    %28 = vector.shape_cast %27 : vector<12xf32> to vector<12x1xf32>
    %cst_12 = arith.constant 1.600000e+01 : f32
    %29 = vector.broadcast %cst_12 : f32 to vector<12x1xf32>
    %30 = arith.subf %29, %28 : vector<12x1xf32>
    %31 = arith.mulf %22, %26 : vector<12x1xf32>
    %32 = arith.mulf %28, %30 : vector<12x1xf32>
    %cst_13 = arith.constant 1.000000e+00 : f32
    %33 = vector.broadcast %cst_13 : f32 to vector<12x1xf32>
    %34 = arith.maximumf %32, %33 : vector<12x1xf32>
    %35 = arith.divf %31, %34 : vector<12x1xf32>
    %cst_14 = arith.constant 1.000000e+00 : f32
    %36 = vector.broadcast %cst_14 : f32 to vector<12x1xf32>
    %37 = arith.subf %12, %36 : vector<12x1xf32>
    %38 = math.exp %37 : vector<12x1xf32>
    %39 = arith.mulf %26, %38 : vector<12x1xf32>
    %cst_15 = arith.constant 1.000000e+00 : f32
    %40 = vector.broadcast %cst_15 : f32 to vector<12x1xf32>
    %41 = arith.maximumf %30, %40 : vector<12x1xf32>
    %42 = arith.divf %39, %41 : vector<12x1xf32>
    %cst_16 = arith.constant 0.000000e+00 : f32
    %43 = vector.broadcast %cst_16 : f32 to vector<12x1xf32>
    %44 = arith.subf %43, %12 : vector<12x1xf32>
    %45 = math.exp %44 : vector<12x1xf32>
    %46 = arith.mulf %22, %45 : vector<12x1xf32>
    %cst_17 = arith.constant 1.000000e+00 : f32
    %47 = vector.broadcast %cst_17 : f32 to vector<12x1xf32>
    %48 = arith.maximumf %28, %47 : vector<12x1xf32>
    %49 = arith.divf %46, %48 : vector<12x1xf32>
    %cst_18 = arith.constant 0.000000e+00 : f32
    %50 = vector.broadcast %cst_18 : f32 to vector<12x1xf32>
    %51 = arith.cmpf oeq, %28, %50 : vector<12x1xf32>
    %cst_19 = arith.constant 0.000000e+00 : f32
    %52 = vector.broadcast %cst_19 : f32 to vector<12x1xf32>
    %53 = arith.cmpf oeq, %30, %52 : vector<12x1xf32>
    %54 = arith.select %53, %49, %35 : vector<12x1xi1>, vector<12x1xf32>
    %55 = arith.select %51, %42, %54 : vector<12x1xi1>, vector<12x1xf32>
    %c12_i32 = arith.constant 12 : i32
    %56 = arith.muli %arg0, %c12_i32 : i32
    %57 = tpu.iota {dimensions = array<i32: 0>} : vector<12x1xi32>
    %58 = vector.broadcast %56 : i32 to vector<12x1xi32>
    %59 = arith.addi %58, %57 : vector<12x1xi32>
    %c12_i32_20 = arith.constant 12 : i32
    %60 = vector.broadcast %c12_i32_20 : i32 to vector<12x1xi32>
    %61 = arith.cmpi slt, %59, %60 : vector<12x1xi32>
    %cst_21 = arith.constant 0.000000e+00 : f32
    %62 = vector.broadcast %cst_21 : f32 to vector<12x1xf32>
    %63 = arith.select %61, %55, %62 : vector<12x1xi1>, vector<12x1xf32>
    %64 = vector.shape_cast %63 : vector<12x1xf32> to vector<1x12x1xf32>
    %cst_22 = arith.constant dense<0.000000e+00> : vector<1xf32>
    %65 = vector.multi_reduction <add>, %64, %cst_22 [1, 2] : vector<1x12x1xf32> to vector<1xf32>
    %66 = vector.shape_cast %65 : vector<1xf32> to vector<1x1x1xf32>
    %67 = vector.extract %66[0, 0, 0] : f32 from vector<1x1x1xf32>
    %68 = vector.broadcast %67 : f32 to vector<1x8x128xf32>
    %c0_23 = arith.constant 0 : index
    %c0_24 = arith.constant 0 : index
    %c0_25 = arith.constant 0 : index
    %69 = vector.load %arg3[%c0_23, %c0_24, %c0_25] : memref<1x8x128xf32, #tpu.memory_space<vmem>>, vector<1x8x128xf32>
    tpu.vector_store %arg3[%c0_23, %c0_24, %c0_25], %68 {strides = array<i32>} : memref<1x8x128xf32, #tpu.memory_space<vmem>>, vector<1x8x128xf32>,
    return
  }
  func.func @transform_0(%arg0: i32) -> (i32, i32) {
    %c0_i32 = arith.constant 0 : i32
    %c0_i32_0 = arith.constant 0 : i32
    return %arg0, %c0_i32 : i32, i32
  }
  func.func @transform_1(%arg0: i32) -> (i32, i32) {
    %c0_i32 = arith.constant 0 : i32
    %c0_i32_0 = arith.constant 0 : i32
    return %arg0, %c0_i32 : i32, i32
  }
  func.func @transform_2(%arg0: i32) -> (i32, i32, i32) {
    %c0_i32 = arith.constant 0 : i32
    %c0_i32_0 = arith.constant 0 : i32
    %c0_i32_1 = arith.constant 0 : i32
    return %arg0, %c0_i32, %c0_i32_0 : i32, i32, i32
  }
}

</mosaic_0001>

<llo_original>
// kernel: tpu_custom_call.1
$region0: #{tpu_custom_call.1}
  #allocation0 [shape = 'u32[]', space=smem, size = 0x4, offset = 0x4, fixed_abs, tag = 'smem constant byte address 0x4 - core index']
  #allocation1 [shape = 'u32[144,128]{1,0:T(1,128)}', space=vmem, size = 0x12000, scoped, tag = 'internal scratch']
  %s0 = inlined_call_operand.hbm [shape: f32[12,16], index: 0, kind: input, shape index: {}]
  %s1 = inlined_call_operand.hbm [shape: f32[12,16], index: 1, kind: input, shape index: {}]
  %s2 = inlined_call_operand.hbm [shape: f32[1,8,128], index: 2, kind: output, shape index: {}]
  %s3 = sld [smem:[#allocation0]]
  $region26: #{tpu_custom_call.1} parent=0
    _
  %s5 = ssub.s32 1, %s3
  %s6 = scalar_select 0, %s5, %s3
  $region1: #{tpu_custom_call.1} parent=0
    #allocation2 [shape = 'u8[8192]{0}', space=vmem, size = 0x2000, scoped, tag = 'input window, operand 0, single buffered']
    #allocation3 [shape = 's32[1]{0}', space=sflag, size = 0x4, scoped, tag = 'scoped memory for tpu_custom_call.1']
    #allocation4 [shape = 's32[1]{0}', space=sflag, size = 0x4, scoped, tag = 'scoped memory for tpu_custom_call.1']
    #allocation5 [shape = 'u8[8192]{0}', space=vmem, size = 0x2000, scoped, tag = 'input window, operand 1, single buffered']
    #allocation6 [shape = 's32[1]{0}', space=sflag, size = 0x4, scoped, tag = 'scoped memory for tpu_custom_call.1']
    #allocation7 [shape = 'u8[4096]{0}', space=vmem, size = 0x1000, scoped, tag = 'output window, operand 0, single buffered']
    %7 = vsyncpa [#allocation3], 0
    %8 = vsyncpa [#allocation6], 0
    %9 = vsyncpa [#allocation4], 0
    // Predicated region
    $region2: #{tpu_custom_call.1} parent=1 // pred_check
      _
    $region3: #{tpu_custom_call.1} parent=1 // pred_check_branch
      %11 = sbr.rel (0) target = $region5
    $region4: #{tpu_custom_call.1} parent=1 // pred_region
      %s13 = ssub.s32 256, 256
      %14 = vsyncadd [#allocation3], %s13
      %s15 = sshll.u32 [#allocation2], 4
      %s16 = int_to_ptr.vmem [resolvable:$true] %s15
      %21 = dma.hbm_to_vmem [thread:$0]  %s0, 256, %s16, [#allocation3], 128, 128, 8
    $region5: #{tpu_custom_call.1} parent=1 // pred_fallthru
      _
    // Predicated region
    $region6: #{tpu_custom_call.1} parent=1 // pred_check
      _
    $region7: #{tpu_custom_call.1} parent=1 // pred_check_branch
      %23 = sbr.rel (0) target = $region9
    $region8: #{tpu_custom_call.1} parent=1 // pred_region
      %s25 = ssub.s32 256, 256
      %26 = vsyncadd [#allocation6], %s25
      %s27 = sshll.u32 [#allocation5], 4
      %s28 = int_to_ptr.vmem [resolvable:$true] %s27
      %33 = dma.hbm_to_vmem [thread:$0]  %s1, 256, %s28, [#allocation6], 128, 128, 8
    $region9: #{tpu_custom_call.1} parent=1 // pred_fallthru
      _
    // Predicated region
    $region10: #{tpu_custom_call.1} parent=1 // pred_check
      _
    $region11: #{tpu_custom_call.1} parent=1 // pred_check_branch
      %35 = sbr.rel (0) target = $region13
    $region12: #{tpu_custom_call.1} parent=1 // pred_region
      %36 = dma.done [#allocation3], 256
    $region13: #{tpu_custom_call.1} parent=1 // pred_fallthru
      _
    // Predicated region
    $region14: #{tpu_custom_call.1} parent=1 // pred_check
      _
    $region15: #{tpu_custom_call.1} parent=1 // pred_check_branch
      %38 = sbr.rel (0) target = $region17
    $region16: #{tpu_custom_call.1} parent=1 // pred_region
      %39 = dma.done [#allocation6], 256
    $region17: #{tpu_custom_call.1} parent=1 // pred_fallthru
      _
    %v40 = vld [vmem:[#allocation2] sm:$0xff]
    %v41 = vld [vmem:[#allocation2 + $0x8] sm:$0xf]
    %v42 = vld [vmem:[#allocation5] sm:$0xff]
    %v43 = vld [vmem:[#allocation5 + $0x8] sm:$0xf]
    %vm44 = vcmp.gt.f32.partialorder %v42, 0.0
    %vm45 = vcmp.gt.f32.partialorder %v43, 0.0
    %vm46 = vcmp.eq.f32.partialorder %v42, 0.0
    %vm47 = vcmp.eq.f32.partialorder %v43, 0.0
    %vm48 = vcmask 130048
    %v49 = vsel %vm48, %v40, -inf
    %50 = vmax.xlane.f32.xlu0 %v49
    %v51 = vpop.xlane.xlu0 %50
    %vm52 = vcmask 125952
    %v53 = vsel %vm52, %v41, -inf
    %54 = vmax.xlane.f32.xlu0 %v53
    %v55 = vpop.xlane.xlu0 %54
    %v56 = vsel %vm48, %v40, inf
    %57 = vmin.xlane.f32.xlu0 %v56
    %v58 = vpop.xlane.xlu0 %57
    %v59 = vsel %vm52, %v41, inf
    %60 = vmin.xlane.f32.xlu0 %v59
    %v61 = vpop.xlane.xlu0 %60
    %v62 = vadd.f32 %v51, %v58
    %v63 = vadd.f32 %v55, %v61
    %v64 = vmul.f32 %v62, 0.5
    %v65 = vmul.f32 %v63, 0.5
    %v66 = vsub.f32 %v64, %v40
    %v67 = vsub.f32 %v65, %v41
    %v68 = vsub.f32 %v40, %v64
    %v69 = vsub.f32 %v41, %v65
    %v70 = vsel %vm44, %v66, %v68
    %v71 = vsel %vm45, %v67, %v69
    %v72 = vmul.f32 %v70, 1.442695
    %v73 = vpow.pop %v72
    %v74 = vmul.f32 %v71, 1.442695
    %v75 = vpow.pop %v74
    %v76 = vsel %vm44, %v73, 0.0
    %v77 = vsel %vm45, %v75, 0.0
    %v78 = vsel %vm48, %v76, 0.0
    %79 = vadd.xlane.f32.xlu0 %v78
    %v80 = vpop.xlane.xlu0 %79
    %v81 = vsel %vm52, %v77, 0.0
    %82 = vadd.xlane.f32.xlu0 %v81
    %v83 = vpop.xlane.xlu0 %82
    %v84 = vsel %vm46, %v73, 0.0
    %v85 = vsel %vm47, %v75, 0.0
    %v86 = vsel %vm48, %v84, 0.0
    %87 = vadd.xlane.f32.xlu0 %v86
    %v88 = vpop.xlane.xlu0 %87
    %v89 = vsel %vm52, %v85, 0.0
    %90 = vadd.xlane.f32.xlu0 %v89
    %v91 = vpop.xlane.xlu0 %90
    %v92 = vsel %vm48, %v42, 0.0
    %93 = vadd.xlane.f32.xlu0 %v92
    %v94 = vpop.xlane.xlu0 %93
    %v95 = vsel %vm52, %v43, 0.0
    %96 = vadd.xlane.f32.xlu0 %v95
    %v97 = vpop.xlane.xlu0 %96
    %v98 = vsub.f32 16.0, %v94
    %v99 = vsub.f32 16.0, %v97
    %v100 = vmul.f32 %v80, %v88
    %v101 = vmul.f32 %v83, %v91
    %v102 = vmul.f32 %v94, %v98
    %v103 = vmul.f32 %v97, %v99
    %v104 = vmax.f32 %v102, 1.0
    %v105 = vmax.f32 %v103, 1.0
    %v106 = vrcp.pop %v104
    %v107 = vmul.f32 %v100, %v106
    %v108 = vrcp.pop %v105
    %v109 = vmul.f32 %v101, %v108
    %v110 = vsub.f32 %v64, 1.0
    %v111 = vsub.f32 %v65, 1.0
    %v112 = vmul.f32 %v110, 1.442695
    %v113 = vpow.pop %v112
    %v114 = vmul.f32 %v111, 1.442695
    %v115 = vpow.pop %v114
    %v116 = vmul.f32 %v88, %v113
    %v117 = vmul.f32 %v91, %v115
    %v118 = vmax.f32 %v98, 1.0
    %v119 = vmax.f32 %v99, 1.0
    %v120 = vrcp.pop %v118
    %v121 = vmul.f32 %v116, %v120
    %v122 = vrcp.pop %v119
    %v123 = vmul.f32 %v117, %v122
    %v124 = vsub.f32 0.0, %v64
    %v125 = vsub.f32 0.0, %v65
    %v126 = vmul.f32 %v124, 1.442695
    %v127 = vpow.pop %v126
    %v128 = vmul.f32 %v125, 1.442695
    %v129 = vpow.pop %v128
    %v130 = vmul.f32 %v80, %v127
    %v131 = vmul.f32 %v83, %v129
    %v132 = vmax.f32 %v94, 1.0
    %v133 = vmax.f32 %v97, 1.0
    %v134 = vrcp.pop %v132
    %v135 = vmul.f32 %v130, %v134
    %v136 = vrcp.pop %v133
    %v137 = vmul.f32 %v131, %v136
    %vm138 = vcmp.eq.f32.partialorder %v94, 0.0
    %vm139 = vcmp.eq.f32.partialorder %v97, 0.0
    %vm140 = vcmp.eq.f32.partialorder %v98, 0.0
    %vm141 = vcmp.eq.f32.partialorder %v99, 0.0
    %v142 = vsel %vm140, %v135, %v107
    %v143 = vsel %vm141, %v137, %v109
    %v144 = vsel %vm138, %v121, %v142
    %v145 = vsel %vm139, %v123, %v143
    %s146 = smul.u32 0, 12
    %v147 = vlaneseq
    %v148 = vshrl.u32 %v147, 7
    %v149 = vadd.s32 %v148, 8
    %v150 = vstv %s146
    %v151 = vadd.s32 %v150, %v148
    %v152 = vadd.s32 %v150, %v149
    %vm153 = vcmp.lt.s32.totalorder %v151, 12
    %vm154 = vcmp.lt.s32.totalorder %v152, 12
    %v155 = vsel %vm153, %v144, 0.0
    %v156 = vsel %vm154, %v145, 0.0
    %vm157 = vcmask 7168
    %v158 = vsel %vm157, %v155, 0.0
    %vm159 = vcmask 3072
    %v160 = vsel %vm159, %v156, 0.0
    %v161 = vadd.f32 %v158, %v160
    %162 = vadd.xlane.f32.xlu0 %v161
    %v163 = vpop.xlane.xlu0 %162
    %v164 = vrot.slane %v163, 4
    %v165 = vadd.f32 %v163, %v164
    %v166 = vrot.slane %v165, 2
    %v167 = vadd.f32 %v165, %v166
    %v168 = vrot.slane %v167, 1
    %v169 = vadd.f32 %v167, %v168
    %s170 = vtos %v169
    %v171 = vstv %s170
    %172 = vst [vmem:[#allocation7] sm:$0xff] %v171
    // Predicated region
    $region18: #{tpu_custom_call.1} parent=1 // pred_check
      _
    $region19: #{tpu_custom_call.1} parent=1 // pred_check_branch
      %174 = sbr.rel (0) target = $region21
    $region20: #{tpu_custom_call.1} parent=1 // pred_region
      %s176 = ssub.s32 128, 128
      %177 = vsyncadd [#allocation4], %s176
      %s179 = sshll.u32 [#allocation7], 4
      %s180 = int_to_ptr.vmem [resolvable:$true] %s179
      %182 = dma.vmem_to_hbm [thread:$0]  %s180, 128, %s2, [#allocation4]
    $region21: #{tpu_custom_call.1} parent=1 // pred_fallthru
      _
    // Predicated region
    $region22: #{tpu_custom_call.1} parent=1 // pred_check
      _
    $region23: #{tpu_custom_call.1} parent=1 // pred_check_branch
      %184 = sbr.rel (0) target = $region25
    $region24: #{tpu_custom_call.1} parent=1 // pred_region
      %185 = dma.done [#allocation4], 128
    $region25: #{tpu_custom_call.1} parent=1 // pred_fallthru
      _
    %186 = vsyncpa [#allocation3], 1
    %187 = vsyncpa [#allocation6], 1
    %188 = vsyncpa [#allocation4], 1

</llo_original>
